<compile_context>
chip_gen: v7x
topology: tpu7x:2x2x1
jax: 0.10.0
libtpu: 0.0.40
codegen_flags: <defaults>
</compile_context>

<pallas_src>
from functools import partial

import jax
import jax.numpy as jnp
from jax.experimental import pallas as pl
from jax.experimental.pallas import tpu as pltpu


# ----------------------------- kernel ---------------------------------------

def _rope_kernel(cos_ref, sin_a_ref, sin_b_ref, q_ref, k_ref, qo_ref, ko_ref,
                 *, half):
    """One (seq-tile, batch) grid step on lane-dense (tS, H*D) blocks.

    cos_ref   : (tS, H*D) cos table, tiled over heads.
    sin_a_ref : (tS, H*D) equals -sin at positions j % D <  D/2, else 0.
    sin_b_ref : (tS, H*D) equals +sin at positions j % D >= D/2, else 0.
    With those masked/sign-folded tables,
        rotate_half(x) * sin == roll(x, -D/2)*sin_a + roll(x, +D/2)*sin_b
    on the packed H*D axis (the cross-head wrap-around lands on zeros).
    """
    cos = cos_ref[...]
    sin_a = sin_a_ref[...]
    sin_b = sin_b_ref[...]

    def apply(x_ref, o_ref):
        x = x_ref[...]
        if x.dtype != cos.dtype:           # f32-compute path for bf16 inputs
            x = x.astype(cos.dtype)
        x_fwd = jnp.roll(x, -half, axis=-1)   # x_fwd[i] == x[i + half]
        x_bwd = jnp.roll(x, half, axis=-1)    # x_bwd[i] == x[i - half]
        o_ref[...] = (x * cos + x_fwd * sin_a + x_bwd * sin_b).astype(o_ref.dtype)

    apply(q_ref, qo_ref)
    apply(k_ref, ko_ref)


# --------------------------- sizing helpers ----------------------------------

def _vmem_limit_bytes():
    """Generation-aware scoped-VMEM limit (~3/4 of physical, capped at 96 MiB)."""
    cap = None
    try:
        cap = int(pltpu.get_tpu_info().vmem_capacity_bytes)
    except Exception:
        cap = None
    if not cap or cap <= 0:
        cap = 64 * 1024 * 1024            # conservative (v7x-sized) fallback
    return max(32 * 1024 * 1024, min(96 * 1024 * 1024, (cap * 3) // 4))


def _pick_seq_tile(S, HD, qk_itemsize, aux_itemsize, budget_bytes, want_two_steps):
    """Largest seq tile keeping the pipelined working set under budget.

    Per seq row: 2x double-buffered (q + k + q_out + k_out + 3 aux tables)
    plus ~6 f32 whole-block temporaries for the in-kernel rolls/products.
    """
    per_row = 2 * HD * (4 * qk_itemsize + 3 * aux_itemsize) + 6 * HD * 4
    max_ts = max(1, budget_bytes // per_row)
    if want_two_steps and S >= 16:        # keep both v7x TensorCores busy at B == 1
        max_ts = min(max_ts, S // 2)
    if max_ts >= S:
        return S
    if S <= 8:
        return S
    max_ts = max(8, (max_ts // 8) * 8)
    for ts in range(max_ts, 7, -8):       # prefer a multiple-of-8 tile dividing S
        if S % ts == 0:
            return ts
    return max_ts                          # ragged last tile: elementwise-safe


# ----------------------------- module ----------------------------------------

class RotaryEmbedding:
    """JAX/Pallas port of the PyTorch RotaryEmbedding module (q, k: [B,S,H,D])."""

    def __init__(self, dim, max_seq_len=1024):
        assert dim % 2 == 0, "head_dim must be even for rotary embeddings"
        self.dim = dim
        self.max_seq_len = max_seq_len
        inv_freq = 1.0 / (10000.0 ** (jnp.arange(0, dim, 2, dtype=jnp.float32) / dim))
        t = jnp.arange(max_seq_len, dtype=jnp.float32)[:, None]          # (L, 1)
        freqs = t @ inv_freq[None, :]                                    # (L, dim//2)
        freqs = jnp.concatenate([freqs, freqs], axis=-1)                 # (L, dim)
        self.cos_cached = jnp.cos(freqs)                                 # (L, dim)
        self.sin_cached = jnp.sin(freqs)                                 # (L, dim)
        self._table_cache = {}

    def _packed_tables(self, S, H, dtype):
        """cos / sin_a / sin_b tiled to (S, H*D), sign and half-mask pre-folded."""
        key = (S, H, jnp.dtype(dtype).name)
        tab = self._table_cache.get(key)
        if tab is None:
            half = self.dim // 2
            cos = self.cos_cached[:S]                       # (S, D)
            s_half = self.sin_cached[:S, :half]             # (S, D/2)
            zeros = jnp.zeros_like(s_half)
            sin_a = jnp.concatenate([-s_half, zeros], axis=-1)   # pairs j -> j + D/2
            sin_b = jnp.concatenate([zeros, s_half], axis=-1)    # pairs j -> j - D/2
            tab = tuple(jnp.tile(t, (1, H)).astype(dtype) for t in (cos, sin_a, sin_b))
            self._table_cache[key] = tab
        return tab

    def __call__(self, q, k, *, compute_dtype=None):
        # q, k: (B, S, H, D)
        B, S, H, D = q.shape
        assert k.shape == q.shape
        assert D == self.dim and S <= self.max_seq_len
        HD = H * D
        half = D // 2

        # Default: f32 compute (cast on store).  On v7x with bf16 inputs pass
        # compute_dtype=jnp.bfloat16 to drop the per-block up/down casts.
        cdt = jnp.float32 if compute_dtype is None else jnp.dtype(compute_dtype)
        cos_p, sin_a, sin_b = self._packed_tables(S, H, cdt)

        # Lane-dense repack: contiguous dims, so these reshapes are free views.
        qp = q.reshape(B, S, HD)
        kp = k.reshape(B, S, HD)

        q_item = jnp.dtype(q.dtype).itemsize
        k_item = jnp.dtype(k.dtype).itemsize
        aux_item = jnp.dtype(cdt).itemsize

        vmem_limit = _vmem_limit_bytes()
        tile_budget = max(16 * 1024 * 1024, vmem_limit - 8 * 1024 * 1024)
        tS = _pick_seq_tile(S, HD, max(q_item, k_item), aux_item, tile_budget,
                            want_two_steps=(B == 1))
        n_s = pl.cdiv(S, tS)

        # S-tile axis is the OUTER grid axis so the cos/sin blocks stay
        # resident across the inner B steps.
        aux_spec = pl.BlockSpec((tS, HD), lambda s, b: (s, 0))
        qk_spec = pl.BlockSpec((None, tS, HD), lambda s, b: (b, s, 0))

        out_shape = (
            jax.ShapeDtypeStruct((B, S, HD), q.dtype),
            jax.ShapeDtypeStruct((B, S, HD), k.dtype),
        )

        cost = pl.CostEstimate(
            flops=int(10 * B * S * HD),
            transcendentals=0,
            bytes_accessed=int(2 * B * S * HD * (q_item + k_item)
                               + 3 * S * HD * aux_item),
        )

        q_emb, k_emb = pl.pallas_call(
            partial(_rope_kernel, half=half),
            out_shape=out_shape,
            grid_spec=pltpu.PrefetchScalarGridSpec(
                num_scalar_prefetch=0,
                grid=(n_s, B),
                in_specs=[aux_spec, aux_spec, aux_spec, qk_spec, qk_spec],
                out_specs=[qk_spec, qk_spec],
            ),
            compiler_params=pltpu.CompilerParams(
                dimension_semantics=("parallel", "parallel"),
                vmem_limit_bytes=int(vmem_limit),
            ),
            cost_estimate=cost,
        )(cos_p, sin_a, sin_b, qp, kp)

        return q_emb.reshape(B, S, H, D), k_emb.reshape(B, S, H, D)


# -------------------- pure-JAX reference (PyTorch semantics) ------------------

def _rotate_half(x):
    d = x.shape[-1] // 2
    return jnp.concatenate([-x[..., d:], x[..., :d]], axis=-1)


def _reference(q, k, cos, sin):
    cos = cos[None, :, None, :]
    sin = sin[None, :, None, :]
    qf = q.astype(jnp.float32)
    kf = k.astype(jnp.float32)
    q_embed = (qf * cos + _rotate_half(qf) * sin).astype(q.dtype)
    k_embed = (kf * cos + _rotate_half(kf) * sin).astype(k.dtype)
    return q_embed, k_embed


if __name__ == "__main__":
    key = jax.random.PRNGKey(0)
    B, S, H, D = 2, 8, 4, 32   # batch, seq, heads, head_dim (H*D = 128: lane-dense)

    kq, kk = jax.random.split(key)
    q = jax.random.normal(kq, (B, S, H, D), dtype=jnp.float32)
    k = jax.random.normal(kk, (B, S, H, D), dtype=jnp.float32)

    rope = RotaryEmbedding(dim=D, max_seq_len=64)
    q_ref32, k_ref32 = _reference(q, k, rope.cos_cached[:S], rope.sin_cached[:S])

    # float32 path (f32 compute)
    q_emb, k_emb = rope(q, k)
    jax.block_until_ready((q_emb, k_emb))
    assert jnp.allclose(q_emb, q_ref32, atol=1e-5, rtol=1e-5)
    assert jnp.allclose(k_emb, k_ref32, atol=1e-5, rtol=1e-5)

    # bfloat16 inputs, default f32 compute (casts on store)
    qb, kb = q.astype(jnp.bfloat16), k.astype(jnp.bfloat16)
    qb_ref, kb_ref = _reference(qb, kb, rope.cos_cached[:S], rope.sin_cached[:S])
    qb_emb, kb_emb = rope(qb, kb)
    jax.block_until_ready((qb_emb, kb_emb))
    assert jnp.allclose(qb_emb.astype(jnp.float32), qb_ref.astype(jnp.float32),
                        atol=2e-2, rtol=2e-2)
    assert jnp.allclose(kb_emb.astype(jnp.float32), kb_ref.astype(jnp.float32),
                        atol=2e-2, rtol=2e-2)

    # bfloat16-native compute (v7x-style path): bf16 intermediates, looser tol
    qn_emb, kn_emb = rope(qb, kb, compute_dtype=jnp.bfloat16)
    jax.block_until_ready((qn_emb, kn_emb))
    assert jnp.allclose(qn_emb.astype(jnp.float32), qb_ref.astype(jnp.float32),
                        atol=7e-2, rtol=5e-2)
    assert jnp.allclose(kn_emb.astype(jnp.float32), kb_ref.astype(jnp.float32),
                        atol=7e-2, rtol=5e-2)

    print("KERNEL_OK")
</pallas_src>

<mosaic_0001>
module attributes {stable_mosaic.version = 11 : i64} {
  func.func @_rope_kernel(%arg0: i32, %arg1: i32, %arg2: memref<8x128xf32, #tpu.memory_space<vmem>>, %arg3: memref<8x128xf32, #tpu.memory_space<vmem>>, %arg4: memref<8x128xf32, #tpu.memory_space<vmem>>, %arg5: memref<1x8x128xf32, #tpu.memory_space<vmem>>, %arg6: memref<1x8x128xf32, #tpu.memory_space<vmem>>, %arg7: memref<1x8x128xf32, #tpu.memory_space<vmem>>, %arg8: memref<1x8x128xf32, #tpu.memory_space<vmem>>) attributes {dimension_semantics = [#tpu.dimension_semantics<parallel>, #tpu.dimension_semantics<parallel>], iteration_bounds = array<i64: 1, 2>, scalar_prefetch = 0 : i64, scratch_operands = 0 : i64, tpu.core_type = #tpu.core_type<tc>, window_params = [{transform_indices = @transform_0, window_bounds = array<i64: 8, 128>}, {transform_indices = @transform_1, window_bounds = array<i64: 8, 128>}, {transform_indices = @transform_2, window_bounds = array<i64: 8, 128>}, {transform_indices = @transform_3, window_bounds = array<i64: 1, 8, 128>}, {transform_indices = @transform_4, window_bounds = array<i64: 1, 8, 128>}, {transform_indices = @transform_5, window_bounds = array<i64: 1, 8, 128>}, {transform_indices = @transform_6, window_bounds = array<i64: 1, 8, 128>}]} {
    %c0 = arith.constant 0 : index
    %c0_0 = arith.constant 0 : index
    %0 = vector.load %arg2[%c0, %c0_0] : memref<8x128xf32, #tpu.memory_space<vmem>>, vector<8x128xf32>
    %c0_1 = arith.constant 0 : index
    %c0_2 = arith.constant 0 : index
    %1 = vector.load %arg3[%c0_1, %c0_2] : memref<8x128xf32, #tpu.memory_space<vmem>>, vector<8x128xf32>
    %c0_3 = arith.constant 0 : index
    %c0_4 = arith.constant 0 : index
    %2 = vector.load %arg4[%c0_3, %c0_4] : memref<8x128xf32, #tpu.memory_space<vmem>>, vector<8x128xf32>
    %c0_5 = arith.constant 0 : index
    %c0_6 = arith.constant 0 : index
    %c0_7 = arith.constant 0 : index
    %3 = vector.load %arg5[%c0_5, %c0_6, %c0_7] : memref<1x8x128xf32, #tpu.memory_space<vmem>>, vector<1x8x128xf32>
    %4 = vector.shape_cast %3 : vector<1x8x128xf32> to vector<8x128xf32>
    %5 = vector.extract_strided_slice %4 {offsets = [0, 16], sizes = [8, 112], strides = [1, 1]} : vector<8x128xf32> to vector<8x112xf32>
    %6 = vector.extract_strided_slice %4 {offsets = [0, 0], sizes = [8, 16], strides = [1, 1]} : vector<8x128xf32> to vector<8x16xf32>
    %7 = tpu.concatenate %5, %6 in 1 : vector<8x112xf32>, vector<8x16xf32> -> vector<8x128xf32>
    %8 = vector.extract_strided_slice %4 {offsets = [0, 112], sizes = [8, 16], strides = [1, 1]} : vector<8x128xf32> to vector<8x16xf32>
    %9 = vector.extract_strided_slice %4 {offsets = [0, 0], sizes = [8, 112], strides = [1, 1]} : vector<8x128xf32> to vector<8x112xf32>
    %10 = tpu.concatenate %8, %9 in 1 : vector<8x16xf32>, vector<8x112xf32> -> vector<8x128xf32>
    %11 = arith.mulf %4, %0 : vector<8x128xf32>
    %12 = arith.mulf %7, %1 : vector<8x128xf32>
    %13 = arith.addf %11, %12 : vector<8x128xf32>
    %14 = arith.mulf %10, %2 : vector<8x128xf32>
    %15 = arith.addf %13, %14 : vector<8x128xf32>
    %c0_8 = arith.constant 0 : index
    %c0_9 = arith.constant 0 : index
    %c0_10 = arith.constant 0 : index
    %16 = vector.load %arg7[%c0_8, %c0_9, %c0_10] : memref<1x8x128xf32, #tpu.memory_space<vmem>>, vector<1x8x128xf32>
    %17 = vector.shape_cast %16 : vector<1x8x128xf32> to vector<8x128xf32>
    %18 = vector.shape_cast %15 : vector<8x128xf32> to vector<1x8x128xf32>
    tpu.vector_store %arg7[%c0_8, %c0_9, %c0_10], %18 {strides = array<i32>} : memref<1x8x128xf32, #tpu.memory_space<vmem>>, vector<1x8x128xf32>,
    %c0_11 = arith.constant 0 : index
    %c0_12 = arith.constant 0 : index
    %c0_13 = arith.constant 0 : index
    %19 = vector.load %arg6[%c0_11, %c0_12, %c0_13] : memref<1x8x128xf32, #tpu.memory_space<vmem>>, vector<1x8x128xf32>
    %20 = vector.shape_cast %19 : vector<1x8x128xf32> to vector<8x128xf32>
    %21 = vector.extract_strided_slice %20 {offsets = [0, 16], sizes = [8, 112], strides = [1, 1]} : vector<8x128xf32> to vector<8x112xf32>
    %22 = vector.extract_strided_slice %20 {offsets = [0, 0], sizes = [8, 16], strides = [1, 1]} : vector<8x128xf32> to vector<8x16xf32>
    %23 = tpu.concatenate %21, %22 in 1 : vector<8x112xf32>, vector<8x16xf32> -> vector<8x128xf32>
    %24 = vector.extract_strided_slice %20 {offsets = [0, 112], sizes = [8, 16], strides = [1, 1]} : vector<8x128xf32> to vector<8x16xf32>
    %25 = vector.extract_strided_slice %20 {offsets = [0, 0], sizes = [8, 112], strides = [1, 1]} : vector<8x128xf32> to vector<8x112xf32>
    %26 = tpu.concatenate %24, %25 in 1 : vector<8x16xf32>, vector<8x112xf32> -> vector<8x128xf32>
    %27 = arith.mulf %20, %0 : vector<8x128xf32>
    %28 = arith.mulf %23, %1 : vector<8x128xf32>
    %29 = arith.addf %27, %28 : vector<8x128xf32>
    %30 = arith.mulf %26, %2 : vector<8x128xf32>
    %31 = arith.addf %29, %30 : vector<8x128xf32>
    %c0_14 = arith.constant 0 : index
    %c0_15 = arith.constant 0 : index
    %c0_16 = arith.constant 0 : index
    %32 = vector.load %arg8[%c0_14, %c0_15, %c0_16] : memref<1x8x128xf32, #tpu.memory_space<vmem>>, vector<1x8x128xf32>
    %33 = vector.shape_cast %32 : vector<1x8x128xf32> to vector<8x128xf32>
    %34 = vector.shape_cast %31 : vector<8x128xf32> to vector<1x8x128xf32>
    tpu.vector_store %arg8[%c0_14, %c0_15, %c0_16], %34 {strides = array<i32>} : memref<1x8x128xf32, #tpu.memory_space<vmem>>, vector<1x8x128xf32>,
    return
  }
  func.func @transform_0(%arg0: i32, %arg1: i32) -> (i32, i32) {
    %c0_i32 = arith.constant 0 : i32
    %c0_i32_0 = arith.constant 0 : i32
    return %arg0, %c0_i32 : i32, i32
  }
  func.func @transform_1(%arg0: i32, %arg1: i32) -> (i32, i32) {
    %c0_i32 = arith.constant 0 : i32
    %c0_i32_0 = arith.constant 0 : i32
    return %arg0, %c0_i32 : i32, i32
  }
  func.func @transform_2(%arg0: i32, %arg1: i32) -> (i32, i32) {
    %c0_i32 = arith.constant 0 : i32
    %c0_i32_0 = arith.constant 0 : i32
    return %arg0, %c0_i32 : i32, i32
  }
  func.func @transform_3(%arg0: i32, %arg1: i32) -> (i32, i32, i32) {
    %c0_i32 = arith.constant 0 : i32
    %c0_i32_0 = arith.constant 0 : i32
    return %arg1, %arg0, %c0_i32 : i32, i32, i32
  }
  func.func @transform_4(%arg0: i32, %arg1: i32) -> (i32, i32, i32) {
    %c0_i32 = arith.constant 0 : i32
    %c0_i32_0 = arith.constant 0 : i32
    return %arg1, %arg0, %c0_i32 : i32, i32, i32
  }
  func.func @transform_5(%arg0: i32, %arg1: i32) -> (i32, i32, i32) {
    %c0_i32 = arith.constant 0 : i32
    %c0_i32_0 = arith.constant 0 : i32
    return %arg1, %arg0, %c0_i32 : i32, i32, i32
  }
  func.func @transform_6(%arg0: i32, %arg1: i32) -> (i32, i32, i32) {
    %c0_i32 = arith.constant 0 : i32
    %c0_i32_0 = arith.constant 0 : i32
    return %arg1, %arg0, %c0_i32 : i32, i32, i32
  }
}

</mosaic_0001>

<llo_original>
// kernel: tpu_custom_call.1
$region0: #{tpu_custom_call.1}
  #allocation0 [shape = 'u32[]', space=smem, size = 0x4, offset = 0x4, fixed_abs, tag = 'smem constant byte address 0x4 - core index']
  #allocation1 [shape = 'u32[144,128]{1,0:T(1,128)}', space=vmem, size = 0x12000, scoped, tag = 'internal scratch']
  %s0 = inlined_call_operand.hbm [shape: f32[8,128], index: 0, kind: input, shape index: {}]
  %s1 = inlined_call_operand.hbm [shape: f32[8,128], index: 1, kind: input, shape index: {}]
  %s2 = inlined_call_operand.hbm [shape: f32[8,128], index: 2, kind: input, shape index: {}]
  %s3 = inlined_call_operand.hbm [shape: f32[2,8,128], index: 3, kind: input, shape index: {}]
  %s4 = inlined_call_operand.hbm [shape: f32[2,8,128], index: 4, kind: input, shape index: {}]
  %s5 = inlined_call_operand.hbm [shape: f32[2,8,128], index: 5, kind: output, shape index: {0}]
  %s6 = inlined_call_operand.hbm [shape: f32[2,8,128], index: 6, kind: output, shape index: {1}]
  %7 = xla_tuple %s5, %s6
  %s8 = sld [smem:[#allocation0]]
  $region81: #{tpu_custom_call.1} parent=0
    _
  %s10 = ssub.s32 1, %s8
  %s11 = scalar_select 0, %s10, %s8
  $region1: #{tpu_custom_call.1} parent=0
    #allocation2 [shape = 'u8[4096]{0}', space=vmem, size = 0x1000, scoped, tag = 'input window, operand 0, single buffered']
    #allocation3 [shape = 's32[2]{0}', space=sflag, size = 0x8, scoped, tag = 'scoped memory for tpu_custom_call.1']
    #allocation4 [shape = 's32[2]{0}', space=sflag, size = 0x8, scoped, tag = 'scoped memory for tpu_custom_call.1']
    #allocation5 [shape = 'u8[4096]{0}', space=vmem, size = 0x1000, scoped, tag = 'input window, operand 1, single buffered']
    #allocation6 [shape = 's32[1]{0}', space=sflag, size = 0x4, scoped, tag = 'scoped memory for tpu_custom_call.1']
    #allocation7 [shape = 'u8[4096]{0}', space=vmem, size = 0x1000, scoped, tag = 'input window, operand 2, single buffered']
    #allocation8 [shape = 'u8[8192]{0}', space=vmem, size = 0x2000, scoped, tag = 'input window, operand 3']
    #allocation9 [shape = 's32[2]{0}', space=sflag, size = 0x8, scoped, tag = 'scoped memory for tpu_custom_call.1']
    #allocation10 [shape = 'u8[8192]{0}', space=vmem, size = 0x2000, scoped, tag = 'input window, operand 4']
    #allocation11 [shape = 'u8[8192]{0}', space=vmem, size = 0x2000, scoped, tag = 'output window, operand 0']
    #allocation12 [shape = 'u8[8192]{0}', space=vmem, size = 0x2000, scoped, tag = 'output window, operand 1']
    #allocation13 [shape = 's32[2]{0}', space=sflag, size = 0x8, scoped, tag = 'scoped memory for tpu_custom_call.1']
    %12 = vsyncpa [#allocation3], 0
    %13 = vsyncpa [#allocation6], 0
    %14 = vsyncpa [#allocation9], 0
    %s15 = scalar_lea.sflag [#allocation9], 1
    %16 = vsyncpa %s15, 0
    %17 = vsyncpa [#allocation4], 0
    %s18 = scalar_lea.sflag [#allocation4], 1
    %19 = vsyncpa %s18, 0
    %20 = vsyncpa [#allocation13], 0
    %s21 = scalar_lea.sflag [#allocation13], 1
    %22 = vsyncpa %s21, 0
    loop: start=0, step=1, limit=4
    $region2: #{tpu_custom_call.1} parent=1 // loop_pre_header
      _
    $region3: #{tpu_custom_call.1} parent=1 // loop_header
      %s24 = sphi 0, %s28
      %p25 = scmp.ge.s32.totalorder %s24, 4
      %s31 = sphi 0, %s43
      %s32 = sphi 0, %s39
      %s33 = sphi 0, %s31
      %s34 = sphi 0, %s32
      %s35 = sphi 0, %s33
      %s36 = sphi 0, %s34
      %s46 = sphi 0, %s48
      %s49 = sphi 0, %s46
      %s50 = sphi 0, %s49
      %s66 = sphi 0, %s50
      %s72 = sphi 0, %s74
      %s75 = sphi 0, %s72
      %s76 = sphi 0, %s75
      %s92 = sphi 0, %s76
      %s98 = sphi 0, %s100
      %s101 = sphi 0, %s98
      %s102 = sphi 0, %s101
      %s118 = sphi 0, %s102
      %s126 = sphi 0, %s128
      %s129 = sphi 0, %s126
      %s130 = sphi 0, %s129
      %s146 = sphi 0, %s130
      %s154 = sphi 0, %s156
      %s157 = sphi 0, %s154
      %s158 = sphi 0, %s157
      %s174 = sphi 0, %s158
      %s182 = sphi 0, %s184
      %s185 = sphi 0, %s182
      %s186 = sphi 0, %s185
      %s202 = sphi 0, %s186
      %s210 = sphi 0, %s212
      %s213 = sphi 0, %s210
      %s214 = sphi 0, %s213
      %s230 = sphi 0, %s214
    $region4: #{tpu_custom_call.1} parent=1 // loop_header_branch
      %27 = sbr.rel (%p25) target = $region8
    $region5: #{tpu_custom_call.1} parent=1 // loop_body
      %s29 = ssub.s32 %s24, 1
      %s30 = ssub.s32 %s24, 2
      %s37 = sadd.s32 1, %s32
      %p38 = scmp.ge.s32.totalorder %s37, 2
      %s39 = scalar_select %p38, 0, %s37
      %s40 = sadd.s32 1, %s31
      %s41 = scalar_select %p38, %s40, %s31
      %p42 = scmp.ge.s32.totalorder %s41, 1
      %s43 = scalar_select %p42, 0, %s41
      %s44 = ssub.s32 %s31, %s43
      %p45 = scmp.eq.s32.totalorder %s44, 0
      %s47 = sadd.s32 %s46, 1
      %s48 = scalar_select %p45, %s46, %s47
      %p51 = pneg %p45
      %p52 = scmp.eq.s32.totalorder %s24, 1
      %p53 = por %p51, %p52
      %p54 = scmp.ne.s32.totalorder %s46, %s49
      %p55 = scmp.eq.s32.totalorder %s24, 0
      %p56 = por %p54, %p55
      %p57 = scmp.ne.s32.totalorder %s46, %s49
      %p58 = scmp.eq.s32.totalorder %s29, 1
      %p59 = por %p57, %p58
      %p60 = scmp.ne.s32.totalorder %s49, %s50
      %p61 = scmp.eq.s32.totalorder %s29, 0
      %p62 = por %p60, %p61
      %p63 = scmp.ne.s32.totalorder %s49, %s50
      %p64 = scmp.eq.s32.totalorder %s30, 1
      %p65 = por %p63, %p64
      %p67 = scmp.ne.s32.totalorder %s50, %s66
      %p68 = scmp.eq.s32.totalorder %s30, 0
      %p69 = por %p67, %p68
      %s70 = ssub.s32 %s31, %s43
      %p71 = scmp.eq.s32.totalorder %s70, 0
      %s73 = sadd.s32 %s72, 1
      %s74 = scalar_select %p71, %s72, %s73
      %p77 = pneg %p71
      %p78 = scmp.eq.s32.totalorder %s24, 1
      %p79 = por %p77, %p78
      %p80 = scmp.ne.s32.totalorder %s72, %s75
      %p81 = scmp.eq.s32.totalorder %s24, 0
      %p82 = por %p80, %p81
      %p83 = scmp.ne.s32.totalorder %s72, %s75
      %p84 = scmp.eq.s32.totalorder %s29, 1
      %p85 = por %p83, %p84
      %p86 = scmp.ne.s32.totalorder %s75, %s76
      %p87 = scmp.eq.s32.totalorder %s29, 0
      %p88 = por %p86, %p87
      %p89 = scmp.ne.s32.totalorder %s75, %s76
      %p90 = scmp.eq.s32.totalorder %s30, 1
      %p91 = por %p89, %p90
      %p93 = scmp.ne.s32.totalorder %s76, %s92
      %p94 = scmp.eq.s32.totalorder %s30, 0
      %p95 = por %p93, %p94
      %s96 = ssub.s32 %s31, %s43
      %p97 = scmp.eq.s32.totalorder %s96, 0
      %s99 = sadd.s32 %s98, 1
      %s100 = scalar_select %p97, %s98, %s99
      %p103 = pneg %p97
      %p104 = scmp.eq.s32.totalorder %s24, 1
      %p105 = por %p103, %p104
      %p106 = scmp.ne.s32.totalorder %s98, %s101
      %p107 = scmp.eq.s32.totalorder %s24, 0
      %p108 = por %p106, %p107
      %p109 = scmp.ne.s32.totalorder %s98, %s101
      %p110 = scmp.eq.s32.totalorder %s29, 1
      %p111 = por %p109, %p110
      %p112 = scmp.ne.s32.totalorder %s101, %s102
      %p113 = scmp.eq.s32.totalorder %s29, 0
      %p114 = por %p112, %p113
      %p115 = scmp.ne.s32.totalorder %s101, %s102
      %p116 = scmp.eq.s32.totalorder %s30, 1
      %p117 = por %p115, %p116
      %p119 = scmp.ne.s32.totalorder %s102, %s118
      %p120 = scmp.eq.s32.totalorder %s30, 0
      %p121 = por %p119, %p120
      %s122 = ssub.s32 %s32, %s39
      %s123 = ssub.s32 %s31, %s43
      %s124 = sor.u32 %s122, %s123
      %p125 = scmp.eq.s32.totalorder %s124, 0
      %s127 = sadd.s32 %s126, 1
      %s128 = scalar_select %p125, %s126, %s127
      %p131 = pneg %p125
      %p132 = scmp.eq.s32.totalorder %s24, 1
      %p133 = por %p131, %p132
      %p134 = scmp.ne.s32.totalorder %s126, %s129
      %p135 = scmp.eq.s32.totalorder %s24, 0
      %p136 = por %p134, %p135
      %p137 = scmp.ne.s32.totalorder %s126, %s129
      %p138 = scmp.eq.s32.totalorder %s29, 1
      %p139 = por %p137, %p138
      %p140 = scmp.ne.s32.totalorder %s129, %s130
      %p141 = scmp.eq.s32.totalorder %s29, 0
      %p142 = por %p140, %p141
      %p143 = scmp.ne.s32.totalorder %s129, %s130
      %p144 = scmp.eq.s32.totalorder %s30, 1
      %p145 = por %p143, %p144
      %p147 = scmp.ne.s32.totalorder %s130, %s146
      %p148 = scmp.eq.s32.totalorder %s30, 0
      %p149 = por %p147, %p148
      %s150 = ssub.s32 %s32, %s39
      %s151 = ssub.s32 %s31, %s43
      %s152 = sor.u32 %s150, %s151
      %p153 = scmp.eq.s32.totalorder %s152, 0
      %s155 = sadd.s32 %s154, 1
      %s156 = scalar_select %p153, %s154, %s155
      %p159 = pneg %p153
      %p160 = scmp.eq.s32.totalorder %s24, 1
      %p161 = por %p159, %p160
      %p162 = scmp.ne.s32.totalorder %s154, %s157
      %p163 = scmp.eq.s32.totalorder %s24, 0
      %p164 = por %p162, %p163
      %p165 = scmp.ne.s32.totalorder %s154, %s157
      %p166 = scmp.eq.s32.totalorder %s29, 1
      %p167 = por %p165, %p166
      %p168 = scmp.ne.s32.totalorder %s157, %s158
      %p169 = scmp.eq.s32.totalorder %s29, 0
      %p170 = por %p168, %p169
      %p171 = scmp.ne.s32.totalorder %s157, %s158
      %p172 = scmp.eq.s32.totalorder %s30, 1
      %p173 = por %p171, %p172
      %p175 = scmp.ne.s32.totalorder %s158, %s174
      %p176 = scmp.eq.s32.totalorder %s30, 0
      %p177 = por %p175, %p176
      %s178 = ssub.s32 %s32, %s39
      %s179 = ssub.s32 %s31, %s43
      %s180 = sor.u32 %s178, %s179
      %p181 = scmp.eq.s32.totalorder %s180, 0
      %s183 = sadd.s32 %s182, 1
      %s184 = scalar_select %p181, %s182, %s183
      %p187 = pneg %p181
      %p188 = scmp.eq.s32.totalorder %s24, 1
      %p189 = por %p187, %p188
      %p190 = scmp.ne.s32.totalorder %s182, %s185
      %p191 = scmp.eq.s32.totalorder %s24, 0
      %p192 = por %p190, %p191
      %p193 = scmp.ne.s32.totalorder %s182, %s185
      %p194 = scmp.eq.s32.totalorder %s29, 1
      %p195 = por %p193, %p194
      %p196 = scmp.ne.s32.totalorder %s185, %s186
      %p197 = scmp.eq.s32.totalorder %s29, 0
      %p198 = por %p196, %p197
      %p199 = scmp.ne.s32.totalorder %s185, %s186
      %p200 = scmp.eq.s32.totalorder %s30, 1
      %p201 = por %p199, %p200
      %p203 = scmp.ne.s32.totalorder %s186, %s202
      %p204 = scmp.eq.s32.totalorder %s30, 0
      %p205 = por %p203, %p204
      %s206 = ssub.s32 %s32, %s39
      %s207 = ssub.s32 %s31, %s43
      %s208 = sor.u32 %s206, %s207
      %p209 = scmp.eq.s32.totalorder %s208, 0
      %s211 = sadd.s32 %s210, 1
      %s212 = scalar_select %p209, %s210, %s211
      %p215 = pneg %p209
      %p216 = scmp.eq.s32.totalorder %s24, 1
      %p217 = por %p215, %p216
      %p218 = scmp.ne.s32.totalorder %s210, %s213
      %p219 = scmp.eq.s32.totalorder %s24, 0
      %p220 = por %p218, %p219
      %p221 = scmp.ne.s32.totalorder %s210, %s213
      %p222 = scmp.eq.s32.totalorder %s29, 1
      %p223 = por %p221, %p222
      %p224 = scmp.ne.s32.totalorder %s213, %s214
      %p225 = scmp.eq.s32.totalorder %s29, 0
      %p226 = por %p224, %p225
      %p227 = scmp.ne.s32.totalorder %s213, %s214
      %p228 = scmp.eq.s32.totalorder %s30, 1
      %p229 = por %p227, %p228
      %p231 = scmp.ne.s32.totalorder %s214, %s230
      %p232 = scmp.eq.s32.totalorder %s30, 0
      %p233 = por %p231, %p232
      %p234 = scmp.le.s32.totalorder 1, %s24
      %p235 = scmp.lt.s32.totalorder %s24, 3
      %p236 = pnand %p234, %p235
      %p237 = pneg %p236
      // Predicated region
      $region9: #{tpu_custom_call.1} parent=5 // pred_check
        _
      $region10: #{tpu_custom_call.1} parent=5 // pred_check_branch
        %239 = sbr.rel (%p236) target = $region12
      $region11: #{tpu_custom_call.1} parent=5 // pred_region
        %s240 = ssub.s32 %s24, 1
        // Predicated region
        $region13: #{tpu_custom_call.1} parent=11 // pred_check
          %p241 = pneg %p62
        $region14: #{tpu_custom_call.1} parent=11 // pred_check_branch
          %243 = sbr.rel (%p241) target = $region16
        $region15: #{tpu_custom_call.1} parent=11 // pred_region
          %s245 = ssub.s32 128, 128
          %246 = vsyncadd [#allocation3], %s245
          %s247 = smul.addr %s33, 128
          %s248 = scalar_lea.hbm %s0, %s247
          %s250 = sshll.u32 [#allocation2], 4
          %s251 = int_to_ptr.vmem [resolvable:$true] %s250
          %253 = dma.hbm_to_vmem [thread:$0]  %s248, 128, %s251, [#allocation3]
        $region16: #{tpu_custom_call.1} parent=11 // pred_fallthru
          _
        // Predicated region
        $region17: #{tpu_custom_call.1} parent=11 // pred_check
          %p254 = pneg %p88
        $region18: #{tpu_custom_call.1} parent=11 // pred_check_branch
          %256 = sbr.rel (%p254) target = $region20
        $region19: #{tpu_custom_call.1} parent=11 // pred_region
          %s258 = ssub.s32 128, 128
          %259 = vsyncadd [#allocation6], %s258
          %s260 = smul.addr %s33, 128
          %s261 = scalar_lea.hbm %s1, %s260
          %s263 = sshll.u32 [#allocation5], 4
          %s264 = int_to_ptr.vmem [resolvable:$true] %s263
          %266 = dma.hbm_to_vmem [thread:$0]  %s261, 128, %s264, [#allocation6]
        $region20: #{tpu_custom_call.1} parent=11 // pred_fallthru
          _
        // Predicated region
        $region21: #{tpu_custom_call.1} parent=11 // pred_check
          %p267 = pneg %p114
        $region22: #{tpu_custom_call.1} parent=11 // pred_check_branch
          %269 = sbr.rel (%p267) target = $region24
        $region23: #{tpu_custom_call.1} parent=11 // pred_region
          %s271 = ssub.s32 128, 128
          %272 = vsyncadd [#allocation6], %s271
          %s273 = smul.addr %s33, 128
          %s274 = scalar_lea.hbm %s2, %s273
          %s276 = sshll.u32 [#allocation7], 4
          %s277 = int_to_ptr.vmem [resolvable:$true] %s276
          %279 = dma.hbm_to_vmem [thread:$0]  %s274, 128, %s277, [#allocation6]
        $region24: #{tpu_custom_call.1} parent=11 // pred_fallthru
          _
      $region12: #{tpu_custom_call.1} parent=5 // pred_fallthru
        _
      %p280 = scmp.lt.s32.totalorder %s24, 2
      // Predicated region
      $region25: #{tpu_custom_call.1} parent=5 // pred_check
        %p281 = pneg %p280
      $region26: #{tpu_custom_call.1} parent=5 // pred_check_branch
        %283 = sbr.rel (%p281) target = $region28
      $region27: #{tpu_custom_call.1} parent=5 // pred_region
        // Predicated region
        $region29: #{tpu_custom_call.1} parent=27 // pred_check
          %p284 = pneg %p136
        $region30: #{tpu_custom_call.1} parent=27 // pred_check_branch
          %286 = sbr.rel (%p284) target = $region32
        $region31: #{tpu_custom_call.1} parent=27 // pred_region
          %s287 = sand.u32 %s24, 1
          %s288 = scalar_lea.sflag [#allocation9], %s287
          %s289 = sand.u32 %s126, 1
          %s290 = smul.addr %s289, 8
          %s291 = scalar_lea.vmem [#allocation8], %s290
          %s293 = ssub.s32 128, 128
          %294 = vsyncadd %s288, %s293
          %s295 = sadd.s32 %s31, %s32
          %s296 = smul.addr %s295, 128
          %s297 = scalar_lea.hbm %s3, %s296
          %s299 = sshll.u32 %s291, 4
          %s300 = int_to_ptr.vmem [resolvable:$true] %s299
          %302 = dma.hbm_to_vmem [thread:$0]  %s297, 128, %s300, %s288
        $region32: #{tpu_custom_call.1} parent=27 // pred_fallthru
          _
        // Predicated region
        $region33: #{tpu_custom_call.1} parent=27 // pred_check
          %p303 = pneg %p164
        $region34: #{tpu_custom_call.1} parent=27 // pred_check_branch
          %305 = sbr.rel (%p303) target = $region36
        $region35: #{tpu_custom_call.1} parent=27 // pred_region
          %s306 = sand.u32 %s24, 1
          %s307 = scalar_lea.sflag [#allocation9], %s306
          %s308 = sand.u32 %s154, 1
          %s309 = smul.addr %s308, 8
          %s310 = scalar_lea.vmem [#allocation10], %s309
          %s312 = ssub.s32 128, 128
          %313 = vsyncadd %s307, %s312
          %s314 = sadd.s32 %s31, %s32
          %s315 = smul.addr %s314, 128
          %s316 = scalar_lea.hbm %s4, %s315
          %s318 = sshll.u32 %s310, 4
          %s319 = int_to_ptr.vmem [resolvable:$true] %s318
          %321 = dma.hbm_to_vmem [thread:$0]  %s316, 128, %s319, %s307
        $region36: #{tpu_custom_call.1} parent=27 // pred_fallthru
          _
      $region28: #{tpu_custom_call.1} parent=5 // pred_fallthru
        _
      %p322 = scmp.le.s32.totalorder 1, %s24
      %p323 = scmp.lt.s32.totalorder %s24, 3
      %p324 = pnand %p322, %p323
      %p325 = pneg %p324
      // Predicated region
      $region37: #{tpu_custom_call.1} parent=5 // pred_check
        _
      $region38: #{tpu_custom_call.1} parent=5 // pred_check_branch
        %327 = sbr.rel (%p324) target = $region40
      $region39: #{tpu_custom_call.1} parent=5 // pred_region
        %s328 = ssub.s32 %s24, 1
        // Predicated region
        $region41: #{tpu_custom_call.1} parent=39 // pred_check
          %p329 = pneg %p62
        $region42: #{tpu_custom_call.1} parent=39 // pred_check_branch
          %331 = sbr.rel (%p329) target = $region44
        $region43: #{tpu_custom_call.1} parent=39 // pred_region
          %332 = dma.done [#allocation3], 128
        $region44: #{tpu_custom_call.1} parent=39 // pred_fallthru
          _
        // Predicated region
        $region45: #{tpu_custom_call.1} parent=39 // pred_check
          %p333 = pneg %p88
        $region46: #{tpu_custom_call.1} parent=39 // pred_check_branch
          %335 = sbr.rel (%p333) target = $region48
        $region47: #{tpu_custom_call.1} parent=39 // pred_region
          %336 = dma.done [#allocation6], 128
        $region48: #{tpu_custom_call.1} parent=39 // pred_fallthru
          _
        // Predicated region
        $region49: #{tpu_custom_call.1} parent=39 // pred_check
          %p337 = pneg %p114
        $region50: #{tpu_custom_call.1} parent=39 // pred_check_branch
          %339 = sbr.rel (%p337) target = $region52
        $region51: #{tpu_custom_call.1} parent=39 // pred_region
          %340 = dma.done [#allocation6], 128
        $region52: #{tpu_custom_call.1} parent=39 // pred_fallthru
          _
        %s341 = sand.u32 %s29, 1
        %s342 = scalar_lea.sflag [#allocation9], %s341
        %s343 = sand.u32 %s129, 1
        %s344 = smul.addr %s343, 8
        %s345 = scalar_lea.vmem [#allocation8], %s344
        // Predicated region
        $region53: #{tpu_custom_call.1} parent=39 // pred_check
          %p346 = pneg %p142
        $region54: #{tpu_custom_call.1} parent=39 // pred_check_branch
          %348 = sbr.rel (%p346) target = $region56
        $region55: #{tpu_custom_call.1} parent=39 // pred_region
          %349 = dma.done %s342, 128
        $region56: #{tpu_custom_call.1} parent=39 // pred_fallthru
          _
        %s350 = sand.u32 %s29, 1
        %s351 = scalar_lea.sflag [#allocation9], %s350
        %s352 = sand.u32 %s157, 1
        %s353 = smul.addr %s352, 8
        %s354 = scalar_lea.vmem [#allocation10], %s353
        // Predicated region
        $region57: #{tpu_custom_call.1} parent=39 // pred_check
          %p355 = pneg %p170
        $region58: #{tpu_custom_call.1} parent=39 // pred_check_branch
          %357 = sbr.rel (%p355) target = $region60
        $region59: #{tpu_custom_call.1} parent=39 // pred_region
          %358 = dma.done %s351, 128
        $region60: #{tpu_custom_call.1} parent=39 // pred_fallthru
          _
        %p359 = pneg %p62
        %p360 = pneg %p59
        %p361 = pneg %p88
        %p362 = pneg %p85
        %p363 = pneg %p114
        %p364 = pneg %p111
        %s365 = sand.u32 %s29, 1
        %s366 = scalar_lea.sflag [#allocation9], %s365
        %s367 = sand.u32 %s129, 1
        %s368 = smul.addr %s367, 8
        %s369 = scalar_lea.vmem [#allocation8], %s368
        %p370 = pneg %p142
        %p371 = pneg %p139
        %s372 = sand.u32 %s29, 1
        %s373 = scalar_lea.sflag [#allocation9], %s372
        %s374 = sand.u32 %s157, 1
        %s375 = smul.addr %s374, 8
        %s376 = scalar_lea.vmem [#allocation10], %s375
        %p377 = pneg %p170
        %p378 = pneg %p167
        %p379 = pneg %p198
        %p380 = pneg %p195
        %s381 = sand.u32 %s185, 1
        %s382 = scalar_lea.sflag [#allocation4], %s381
        %s383 = sand.u32 %s185, 1
        %s384 = smul.addr %s383, 8
        %s385 = scalar_lea.vmem [#allocation11], %s384
        %p386 = pneg %p226
        %p387 = pneg %p223
        %s388 = sand.u32 %s213, 1
        %s389 = scalar_lea.sflag [#allocation13], %s388
        %s390 = sand.u32 %s213, 1
        %s391 = smul.addr %s390, 8
        %s392 = scalar_lea.vmem [#allocation12], %s391
        %v393 = vld [vmem:[#allocation2] sm:$0xff]
        %v394 = vld [vmem:[#allocation5] sm:$0xff]
        %v395 = vld [vmem:[#allocation7] sm:$0xff]
        %v396 = vld [vmem:[%s345] sm:$0xff]
        %398 = vrot.lane.b32.xlu0 %v396, 112
        %v399 = vpop.permute.xlu0 %398
        %401 = vrot.lane.b32.xlu0 %v396, 16
        %v402 = vpop.permute.xlu0 %401
        %v404 = vmul.f32 %v396, %v393
        %v405 = vmul.f32 %v399, %v394
        %v406 = vadd.f32 %v404, %v405
        %v407 = vmul.f32 %v402, %v395
        %v408 = vadd.f32 %v406, %v407
        %409 = vst [vmem:[%s385] sm:$0xff] %v408
        %v410 = vld [vmem:[%s354] sm:$0xff]
        %412 = vrot.lane.b32.xlu0 %v410, 112
        %v413 = vpop.permute.xlu0 %412
        %415 = vrot.lane.b32.xlu0 %v410, 16
        %v416 = vpop.permute.xlu0 %415
        %v418 = vmul.f32 %v410, %v393
        %v419 = vmul.f32 %v413, %v394
        %v420 = vadd.f32 %v418, %v419
        %v421 = vmul.f32 %v416, %v395
        %v422 = vadd.f32 %v420, %v421
        %423 = vst [vmem:[%s392] sm:$0xff] %v422
        %s424 = sand.u32 %s185, 1
        %s425 = scalar_lea.sflag [#allocation4], %s424
        %s426 = sand.u32 %s185, 1
        %s427 = smul.addr %s426, 8
        %s428 = scalar_lea.vmem [#allocation11], %s427
        %s429 = sand.u32 %s213, 1
        %s430 = scalar_lea.sflag [#allocation13], %s429
        %s431 = sand.u32 %s213, 1
        %s432 = smul.addr %s431, 8
        %s433 = scalar_lea.vmem [#allocation12], %s432
        // Predicated region
        $region61: #{tpu_custom_call.1} parent=39 // pred_check
          %p434 = pneg %p195
        $region62: #{tpu_custom_call.1} parent=39 // pred_check_branch
          %436 = sbr.rel (%p434) target = $region64
        $region63: #{tpu_custom_call.1} parent=39 // pred_region
          %s438 = ssub.s32 128, 128
          %439 = vsyncadd %s425, %s438
          %s440 = sadd.s32 %s33, %s34
          %s441 = smul.addr %s440, 128
          %s442 = scalar_lea.hbm %s5, %s441
          %s444 = sshll.u32 %s428, 4
          %s445 = int_to_ptr.vmem [resolvable:$true] %s444
          %447 = dma.vmem_to_hbm [thread:$0]  %s445, 128, %s442, %s425
        $region64: #{tpu_custom_call.1} parent=39 // pred_fallthru
          _
        // Predicated region
        $region65: #{tpu_custom_call.1} parent=39 // pred_check
          %p448 = pneg %p223
        $region66: #{tpu_custom_call.1} parent=39 // pred_check_branch
          %450 = sbr.rel (%p448) target = $region68
        $region67: #{tpu_custom_call.1} parent=39 // pred_region
          %s452 = ssub.s32 128, 128
          %453 = vsyncadd %s430, %s452
          %s454 = sadd.s32 %s33, %s34
          %s455 = smul.addr %s454, 128
          %s456 = scalar_lea.hbm %s6, %s455
          %s458 = sshll.u32 %s433, 4
          %s459 = int_to_ptr.vmem [resolvable:$true] %s458
          %461 = dma.vmem_to_hbm [thread:$0]  %s459, 128, %s456, %s430
        $region68: #{tpu_custom_call.1} parent=39 // pred_fallthru
          _
      $region40: #{tpu_custom_call.1} parent=5 // pred_fallthru
        _
      %p462 = scmp.le.s32.totalorder 2, %s24
      // Predicated region
      $region69: #{tpu_custom_call.1} parent=5 // pred_check
        %p463 = pneg %p462
      $region70: #{tpu_custom_call.1} parent=5 // pred_check_branch
        %465 = sbr.rel (%p463) target = $region72
      $region71: #{tpu_custom_call.1} parent=5 // pred_region
        %s466 = ssub.s32 %s24, 2
        // Predicated region
        $region73: #{tpu_custom_call.1} parent=71 // pred_check
          %p467 = pneg %p201
        $region74: #{tpu_custom_call.1} parent=71 // pred_check_branch
          %469 = sbr.rel (%p467) target = $region76
        $region75: #{tpu_custom_call.1} parent=71 // pred_region
          %s470 = sand.u32 %s186, 1
          %s471 = scalar_lea.sflag [#allocation4], %s470
          %s472 = sand.u32 %s186, 1
          %s473 = smul.addr %s472, 8
          %s474 = scalar_lea.vmem [#allocation11], %s473
          %475 = dma.done %s471, 128
        $region76: #{tpu_custom_call.1} parent=71 // pred_fallthru
          _
        // Predicated region
        $region77: #{tpu_custom_call.1} parent=71 // pred_check
          %p476 = pneg %p229
        $region78: #{tpu_custom_call.1} parent=71 // pred_check_branch
          %478 = sbr.rel (%p476) target = $region80
        $region79: #{tpu_custom_call.1} parent=71 // pred_region
          %s479 = sand.u32 %s214, 1
          %s480 = scalar_lea.sflag [#allocation13], %s479
          %s481 = sand.u32 %s214, 1
          %s482 = smul.addr %s481, 8
          %s483 = scalar_lea.vmem [#allocation12], %s482
          %484 = dma.done %s480, 128
        $region80: #{tpu_custom_call.1} parent=71 // pred_fallthru
          _
      $region72: #{tpu_custom_call.1} parent=5 // pred_fallthru
        _
    $region6: #{tpu_custom_call.1} parent=1 // loop_footer
      %s28 = sadd.s32 1, %s24
    $region7: #{tpu_custom_call.1} parent=1 // loop_footer_branch
      %23 = sbr.rel target = $region3
    $region8: #{tpu_custom_call.1} parent=1 // loop_exit
      _
    %485 = vsyncpa [#allocation3], 1
    %s486 = scalar_lea.sflag [#allocation3], 1
    %487 = vsyncpa %s486, 1
    %488 = vsyncpa [#allocation6], 1
    %489 = vsyncpa [#allocation9], 1
    %s490 = scalar_lea.sflag [#allocation9], 1
    %491 = vsyncpa %s490, 1
    %492 = vsyncpa [#allocation4], 1
    %s493 = scalar_lea.sflag [#allocation4], 1
    %494 = vsyncpa %s493, 1
    %495 = vsyncpa [#allocation13], 1
    %s496 = scalar_lea.sflag [#allocation13], 1
    %497 = vsyncpa %s496, 1

</llo_original>
